<compile_context>
chip_gen: v6e
topology: v6e:2x2x1
jax: 0.10.0
libtpu: 0.0.40
codegen_flags: <defaults>
</compile_context>

<pallas_src>
import functools

import jax
import jax.numpy as jnp
from jax.experimental import pallas as pl
from jax.experimental.pallas import tpu as pltpu


def _round_up(x, m):
    return (x + m - 1) // m * m


def gated_attention_kernel(x_ref, w1_ref, w2_ref, aux_ref, out_ref, *, N, D, H):
    """Whole gated-attention MIL forward in one kernel invocation.

    x_ref   : (N, C*Hs*Ws) flattened instances (mean-pool folded into w1)
    w1_ref  : (C*Hs*Ws, D) backbone-tail weight, pre-scaled by 1/(Hs*Ws)
    w2_ref  : (D, P)       fused weight  [wv | wu | wsil | wc | zero pad]
    aux_ref : (3, P)       row 0: [bb | 0],  row 1: fused bias [bv|bu|bsil|bc|0],
                           row 2: [ww^T | 0]
    out_ref : (N+1, P-2H)  rows 0..N-1: [sil | feat@wc+bc | 0]  (lane dense),
                           row N: attention-weighted sum of those rows
                           (lanes 2:2+K hold the bag classification).
    """
    # ---- backbone tail: (mean-pool o Linear) folded into a single MXU matmul,
    #      then bias + ReLU on the VPU ----
    feat = jnp.dot(x_ref[...], w1_ref[...], preferred_element_type=jnp.float32)
    feat = jnp.maximum(feat + aux_ref[0:1, 0:D], 0.0)              # (N, D)

    # ---- one fused lane-dense matmul: [attention_v | attention_u | sil | cls_i] ----
    z = jnp.dot(feat, w2_ref[...], preferred_element_type=jnp.float32)
    z = z + aux_ref[1:2, :]                                        # (N, P)

    v = jnp.tanh(z[:, 0:H])                                        # (N, H)   EUP
    u = jax.nn.sigmoid(z[:, H:2 * H])                              # (N, H)   EUP
    tail = z[:, 2 * H:]                                            # (N, P-2H) = [sil | cls_i | 0]

    # ---- attention scores on VPU + XLU (no degenerate (H,1) MXU matmul) ----
    ww_row = aux_ref[2:3, 0:H]                                     # (1, H)
    att = jnp.sum(v * u * ww_row, axis=1, keepdims=True)           # (N, 1)
    # attention_weights bias bw is constant across instances and softmax is
    # shift-invariant, so it is dropped (cannot affect either output).

    # ---- softmax over the N instances (sublane direction, tiny) ----
    m = jnp.max(att, axis=0, keepdims=True)
    e = jnp.exp(att - m)
    denom = jnp.sum(e, axis=0, keepdims=True)
    r = pl.reciprocal(denom, approx=True)                          # EUP slot
    r = r * (2.0 - denom * r)                                      # one Newton step -> ~f32 exact
    w = e * r                                                      # (N, 1)

    # ---- bag-level reduction: softmax weights sum to 1, so
    # classifier(att @ feat) == att @ (feat @ wc + bc), already in `tail` lanes. ----
    bag = jnp.sum(w * tail, axis=0, keepdims=True)                 # (1, P-2H)

    out_ref[0:N, :] = tail
    out_ref[N:N + 1, :] = bag


def pack_params(params, Hs, Ws):
    """One-time repack of the 13 PyTorch-style parameters into 3 VMEM slabs."""
    D = params["wb"].shape[1]
    H = params["wv"].shape[1]
    K = params["wc"].shape[1]
    P = _round_up(2 * H + 2 + K, 128)

    # Fold the (Hs, Ws) global-average pool into the backbone-tail weight.
    # x.reshape(N, -1) flattens (C, Hs, Ws) channel-major, so each wb row is
    # repeated Hs*Ws times consecutively and scaled by 1/(Hs*Ws).
    w1 = jnp.repeat(params["wb"], Hs * Ws, axis=0) / float(Hs * Ws)   # (C*Hs*Ws, D)

    w2 = jnp.zeros((D, P), jnp.float32)
    w2 = w2.at[:, 0:H].set(params["wv"])
    w2 = w2.at[:, H:2 * H].set(params["wu"])
    w2 = w2.at[:, 2 * H:2 * H + 2].set(params["wsil"])
    w2 = w2.at[:, 2 * H + 2:2 * H + 2 + K].set(params["wc"])

    aux = jnp.zeros((3, P), jnp.float32)
    aux = aux.at[0, 0:D].set(params["bb"][0])
    aux = aux.at[1, 0:H].set(params["bv"][0])
    aux = aux.at[1, H:2 * H].set(params["bu"][0])
    aux = aux.at[1, 2 * H:2 * H + 2].set(params["bsil"][0])
    aux = aux.at[1, 2 * H + 2:2 * H + 2 + K].set(params["bc"][0])
    aux = aux.at[2, 0:H].set(params["ww"][:, 0])
    # params["bw"] intentionally unused (softmax shift-invariance).

    return {"w1": w1, "w2": w2, "aux": aux, "D": D, "H": H, "K": K, "P": P}


def gated_attention_forward(x, packed):
    """x: (1, N, C, Hs, Ws) float32 -> (classification (1, K), sil (N, 2))."""
    x = jnp.squeeze(x, axis=0)                   # (N, C, Hs, Ws)
    N = x.shape[0]
    x_flat = x.reshape(N, -1)                    # (N, C*Hs*Ws)

    D, H, K, P = packed["D"], packed["H"], packed["K"], packed["P"]
    tail_w = P - 2 * H                           # lane-dense output width (128 here)

    vmem = pl.BlockSpec(memory_space=pltpu.MemorySpace.VMEM)
    out = pl.pallas_call(
        functools.partial(gated_attention_kernel, N=N, D=D, H=H),
        out_shape=jax.ShapeDtypeStruct((N + 1, tail_w), jnp.float32),
        in_specs=[vmem, vmem, vmem, vmem],
        out_specs=vmem,
        compiler_params=pltpu.CompilerParams(vmem_limit_bytes=32 * 1024 * 1024),
    )(x_flat, packed["w1"], packed["w2"], packed["aux"])

    sil = out[0:N, 0:2]                          # per-instance logits
    cls = out[N:N + 1, 2:2 + K]                  # bag logits
    return cls, sil


def reference_forward(x, params):
    x = jnp.squeeze(x, axis=0)
    pooled = jnp.mean(x, axis=(2, 3))
    feat = jnp.maximum(pooled @ params["wb"] + params["bb"], 0.0)
    sil = feat @ params["wsil"] + params["bsil"]
    v = jnp.tanh(feat @ params["wv"] + params["bv"])
    u = jax.nn.sigmoid(feat @ params["wu"] + params["bu"])
    att = (v * u) @ params["ww"] + params["bw"]          # (N, 1)
    att = att.T                                          # (1, N)
    att = jax.nn.softmax(att, axis=1)
    gated = att @ feat                                   # (1, D)
    cls = gated @ params["wc"] + params["bc"]
    return cls, sil


def init_params(key, C, D, H, K):
    ks = jax.random.split(key, 6)
    return {
        "wb":   jax.random.normal(ks[0], (C, D), jnp.float32) * 0.1,
        "bb":   jnp.zeros((1, D), jnp.float32),
        "wsil": jax.random.normal(ks[1], (D, 2), jnp.float32) * 0.1,
        "bsil": jnp.full((1, 2), 0.01, jnp.float32),
        "wv":   jax.random.normal(ks[2], (D, H), jnp.float32) * 0.1,
        "bv":   jnp.full((1, H), 0.02, jnp.float32),
        "wu":   jax.random.normal(ks[3], (D, H), jnp.float32) * 0.1,
        "bu":   jnp.full((1, H), -0.02, jnp.float32),
        "ww":   jax.random.normal(ks[4], (H, 1), jnp.float32) * 0.1,
        "bw":   jnp.full((1, 1), 0.03, jnp.float32),
        "wc":   jax.random.normal(ks[5], (D, K), jnp.float32) * 0.1,
        "bc":   jnp.zeros((1, K), jnp.float32),
    }


if __name__ == "__main__":
    key = jax.random.PRNGKey(0)
    k_x, k_p = jax.random.split(key)

    N, C, Hs, Ws = 8, 4, 16, 16          # bag of 8 instances, 4 channels, 16x16
    D, H, K = 32, 64, 2                  # instance_hidden=32, hidden=64, classes=2

    x = jax.random.normal(k_x, (1, N, C, Hs, Ws), jnp.float32)
    params = init_params(k_p, C, D, H, K)
    packed = pack_params(params, Hs, Ws)

    cls, sil = gated_attention_forward(x, packed)
    jax.block_until_ready((cls, sil))

    cls_ref, sil_ref = reference_forward(x, params)
    assert cls.shape == (1, K) and sil.shape == (N, 2)
    assert jnp.allclose(cls, cls_ref, atol=1e-5, rtol=1e-5)
    assert jnp.allclose(sil, sil_ref, atol=1e-5, rtol=1e-5)

    print("KERNEL_OK")
</pallas_src>

<mosaic_0001>
module attributes {stable_mosaic.version = 11 : i64} {
  func.func @gated_attention_kernel(%arg0: memref<8x1024xf32, #tpu.memory_space<vmem>>, %arg1: memref<1024x32xf32, #tpu.memory_space<vmem>>, %arg2: memref<32x256xf32, #tpu.memory_space<vmem>>, %arg3: memref<3x256xf32, #tpu.memory_space<vmem>>, %arg4: memref<9x128xf32, #tpu.memory_space<vmem>>) attributes {dimension_semantics = [], scalar_prefetch = 0 : i64, scratch_operands = 0 : i64, tpu.core_type = #tpu.core_type<tc>} {
    %c0 = arith.constant 0 : index
    %c0_0 = arith.constant 0 : index
    %0 = vector.load %arg0[%c0, %c0_0] : memref<8x1024xf32, #tpu.memory_space<vmem>>, vector<8x1024xf32>
    %c0_1 = arith.constant 0 : index
    %c0_2 = arith.constant 0 : index
    %1 = vector.load %arg1[%c0_1, %c0_2] : memref<1024x32xf32, #tpu.memory_space<vmem>>, vector<1024x32xf32>
    %cst = arith.constant dense<0.000000e+00> : vector<8x32xf32>
    %2 = tpu.matmul %0, %1, %cst {dimension_numbers = #tpu.dot_dimension_numbers<[1], [0], [0], [1], [0, 0, 1, 1], [], []>} : vector<8x1024xf32>, vector<1024x32xf32>, vector<8x32xf32> -> vector<8x32xf32>
    %c0_3 = arith.constant 0 : index
    %c0_4 = arith.constant 0 : index
    %3 = vector.load %arg3[%c0_3, %c0_4] : memref<3x256xf32, #tpu.memory_space<vmem>>, vector<1x32xf32>
    %4 = vector.broadcast %3 : vector<1x32xf32> to vector<8x32xf32>
    %5 = arith.addf %2, %4 : vector<8x32xf32>
    %cst_5 = arith.constant 0.000000e+00 : f32
    %6 = vector.broadcast %cst_5 : f32 to vector<8x32xf32>
    %7 = arith.maximumf %5, %6 : vector<8x32xf32>
    %c0_6 = arith.constant 0 : index
    %c0_7 = arith.constant 0 : index
    %8 = vector.load %arg2[%c0_6, %c0_7] : memref<32x256xf32, #tpu.memory_space<vmem>>, vector<32x256xf32>
    %cst_8 = arith.constant dense<0.000000e+00> : vector<8x256xf32>
    %9 = tpu.matmul %7, %8, %cst_8 {dimension_numbers = #tpu.dot_dimension_numbers<[1], [0], [0], [1], [0, 0, 1, 1], [], []>} : vector<8x32xf32>, vector<32x256xf32>, vector<8x256xf32> -> vector<8x256xf32>
    %c1 = arith.constant 1 : index
    %c0_9 = arith.constant 0 : index
    %10 = vector.load %arg3[%c1, %c0_9] : memref<3x256xf32, #tpu.memory_space<vmem>>, vector<1x256xf32>
    %11 = vector.broadcast %10 : vector<1x256xf32> to vector<8x256xf32>
    %12 = arith.addf %9, %11 : vector<8x256xf32>
    %13 = vector.extract_strided_slice %12 {offsets = [0, 0], sizes = [8, 64], strides = [1, 1]} : vector<8x256xf32> to vector<8x64xf32>
    %14 = math.tanh %13 : vector<8x64xf32>
    %15 = vector.extract_strided_slice %12 {offsets = [0, 64], sizes = [8, 64], strides = [1, 1]} : vector<8x256xf32> to vector<8x64xf32>
    %16 = arith.negf %15 : vector<8x64xf32>
    %17 = math.exp %16 : vector<8x64xf32>
    %cst_10 = arith.constant 1.000000e+00 : f32
    %18 = vector.broadcast %cst_10 : f32 to vector<8x64xf32>
    %19 = arith.addf %18, %17 : vector<8x64xf32>
    %20 = arith.divf %18, %19 : vector<8x64xf32>
    %21 = vector.extract_strided_slice %12 {offsets = [0, 128], sizes = [8, 128], strides = [1, 1]} : vector<8x256xf32> to vector<8x128xf32>
    %c2 = arith.constant 2 : index
    %c0_11 = arith.constant 0 : index
    %22 = vector.load %arg3[%c2, %c0_11] : memref<3x256xf32, #tpu.memory_space<vmem>>, vector<1x64xf32>
    %23 = arith.mulf %14, %20 : vector<8x64xf32>
    %24 = vector.broadcast %22 : vector<1x64xf32> to vector<8x64xf32>
    %25 = arith.mulf %23, %24 : vector<8x64xf32>
    %cst_12 = arith.constant dense<0.000000e+00> : vector<8xf32>
    %26 = vector.multi_reduction <add>, %25, %cst_12 [1] : vector<8x64xf32> to vector<8xf32>
    %27 = vector.shape_cast %26 : vector<8xf32> to vector<8x1xf32>
    %cst_13 = arith.constant dense<0xFF800000> : vector<1xf32>
    %28 = vector.multi_reduction <maximumf>, %27, %cst_13 [0] : vector<8x1xf32> to vector<1xf32>
    %29 = vector.shape_cast %28 : vector<1xf32> to vector<1x1xf32>
    %30 = vector.broadcast %29 : vector<1x1xf32> to vector<8x1xf32>
    %31 = arith.subf %27, %30 : vector<8x1xf32>
    %32 = math.exp %31 : vector<8x1xf32>
    %cst_14 = arith.constant dense<0.000000e+00> : vector<1xf32>
    %33 = vector.multi_reduction <add>, %32, %cst_14 [0] : vector<8x1xf32> to vector<1xf32>
    %34 = vector.shape_cast %33 : vector<1xf32> to vector<1x1xf32>
    %35 = tpu.reciprocal %34 {approx = true} : vector<1x1xf32> -> vector<1x1xf32>
    %36 = arith.mulf %34, %35 : vector<1x1xf32>
    %cst_15 = arith.constant 2.000000e+00 : f32
    %37 = vector.broadcast %cst_15 : f32 to vector<1x1xf32>
    %38 = arith.subf %37, %36 : vector<1x1xf32>
    %39 = arith.mulf %35, %38 : vector<1x1xf32>
    %40 = vector.broadcast %39 : vector<1x1xf32> to vector<8x1xf32>
    %41 = arith.mulf %32, %40 : vector<8x1xf32>
    %42 = vector.broadcast %41 : vector<8x1xf32> to vector<8x128xf32>
    %43 = arith.mulf %42, %21 : vector<8x128xf32>
    %cst_16 = arith.constant dense<0.000000e+00> : vector<128xf32>
    %44 = vector.multi_reduction <add>, %43, %cst_16 [0] : vector<8x128xf32> to vector<128xf32>
    %45 = vector.shape_cast %44 : vector<128xf32> to vector<1x128xf32>
    %c0_17 = arith.constant 0 : index
    %c0_18 = arith.constant 0 : index
    %46 = vector.load %arg4[%c0_17, %c0_18] : memref<9x128xf32, #tpu.memory_space<vmem>>, vector<8x128xf32>
    tpu.vector_store %arg4[%c0_17, %c0_18], %21 {strides = array<i32>} : memref<9x128xf32, #tpu.memory_space<vmem>>, vector<8x128xf32>,
    %c8 = arith.constant 8 : index
    %c0_19 = arith.constant 0 : index
    %47 = vector.load %arg4[%c8, %c0_19] : memref<9x128xf32, #tpu.memory_space<vmem>>, vector<1x128xf32>
    tpu.vector_store %arg4[%c8, %c0_19], %45 {strides = array<i32>} : memref<9x128xf32, #tpu.memory_space<vmem>>, vector<1x128xf32>,
    return
  }
}

</mosaic_0001>

<llo_original>
// kernel: tpu_custom_call.1
$region0: #{tpu_custom_call.1}
  #allocation0 [shape = 'u32[]', space=smem, size = 0x4, offset = 0x4, fixed_abs, tag = 'smem constant byte address 0x4 - core index']
  #allocation1 [shape = 'u32[144,128]{1,0:T(1,128)}', space=vmem, size = 0x12000, scoped, tag = 'internal scratch']
  %s0 = inlined_call_operand.vmem [shape: f32[8,1024], index: 0, kind: input, shape index: {}]
  %s1 = inlined_call_operand.vmem [shape: f32[1024,32], index: 1, kind: input, shape index: {}]
  %s2 = inlined_call_operand.vmem [shape: f32[32,256], index: 2, kind: input, shape index: {}]
  %s3 = inlined_call_operand.vmem [shape: f32[3,256], index: 3, kind: input, shape index: {}]
  %s4 = inlined_call_operand.hbm [shape: f32[9,128], index: 4, kind: output, shape index: {}]
  %s5 = sld [smem:[#allocation0]]
  $region26: #{tpu_custom_call.1} parent=0
    _
  %s7 = ssub.s32 1, %s5
  %s8 = scalar_select 0, %s7, %s5
  $region1: #{tpu_custom_call.1} parent=0
    #allocation2 [shape = 'u8[8192]{0}', space=vmem, size = 0x2000, scoped, tag = 'output window, operand 0, single buffered']
    #allocation3 [shape = 's32[1]{0}', space=sflag, size = 0x4, scoped, tag = 'scoped memory for tpu_custom_call.1']
    %9 = vsyncpa [#allocation3], 0
    // Predicated region
    $region2: #{tpu_custom_call.1} parent=1 // pred_check
      _
    $region3: #{tpu_custom_call.1} parent=1 // pred_check_branch
      %11 = sbr.rel (0) target = $region5
    $region4: #{tpu_custom_call.1} parent=1 // pred_region
      _
    $region5: #{tpu_custom_call.1} parent=1 // pred_fallthru
      _
    // Predicated region
    $region6: #{tpu_custom_call.1} parent=1 // pred_check
      _
    $region7: #{tpu_custom_call.1} parent=1 // pred_check_branch
      %13 = sbr.rel (0) target = $region9
    $region8: #{tpu_custom_call.1} parent=1 // pred_region
      _
    $region9: #{tpu_custom_call.1} parent=1 // pred_fallthru
      _
    // Predicated region
    $region10: #{tpu_custom_call.1} parent=1 // pred_check
      _
    $region11: #{tpu_custom_call.1} parent=1 // pred_check_branch
      %15 = sbr.rel (0) target = $region13
    $region12: #{tpu_custom_call.1} parent=1 // pred_region
      _
    $region13: #{tpu_custom_call.1} parent=1 // pred_fallthru
      _
    // Predicated region
    $region14: #{tpu_custom_call.1} parent=1 // pred_check
      _
    $region15: #{tpu_custom_call.1} parent=1 // pred_check_branch
      %17 = sbr.rel (0) target = $region17
    $region16: #{tpu_custom_call.1} parent=1 // pred_region
      _
    $region17: #{tpu_custom_call.1} parent=1 // pred_fallthru
      _
    %v18 = vld [vmem:[%s0] sm:$0xff]
    %v19 = vld [vmem:[%s0 + $0x8] sm:$0xff]
    %v20 = vld [vmem:[%s0 + $0x10] sm:$0xff]
    %v21 = vld [vmem:[%s0 + $0x18] sm:$0xff]
    %v22 = vld [vmem:[%s0 + $0x20] sm:$0xff]
    %v23 = vld [vmem:[%s0 + $0x28] sm:$0xff]
    %v24 = vld [vmem:[%s0 + $0x30] sm:$0xff]
    %v25 = vld [vmem:[%s0 + $0x38] sm:$0xff]
    %v26 = vld [vmem:[%s1] sm:$0xff]
    %v27 = vld [vmem:[%s1 + $0x8] sm:$0xff]
    %v28 = vld [vmem:[%s1 + $0x10] sm:$0xff]
    %v29 = vld [vmem:[%s1 + $0x18] sm:$0xff]
    %v30 = vld [vmem:[%s1 + $0x20] sm:$0xff]
    %v31 = vld [vmem:[%s1 + $0x28] sm:$0xff]
    %v32 = vld [vmem:[%s1 + $0x30] sm:$0xff]
    %v33 = vld [vmem:[%s1 + $0x38] sm:$0xff]
    %v34 = vld [vmem:[%s1 + $0x40] sm:$0xff]
    %v35 = vld [vmem:[%s1 + $0x48] sm:$0xff]
    %v36 = vld [vmem:[%s1 + $0x50] sm:$0xff]
    %v37 = vld [vmem:[%s1 + $0x58] sm:$0xff]
    %v38 = vld [vmem:[%s1 + $0x60] sm:$0xff]
    %v39 = vld [vmem:[%s1 + $0x68] sm:$0xff]
    %v40 = vld [vmem:[%s1 + $0x70] sm:$0xff]
    %v41 = vld [vmem:[%s1 + $0x78] sm:$0xff]
    %v42 = vld [vmem:[%s1 + $0x80] sm:$0xff]
    %v43 = vld [vmem:[%s1 + $0x88] sm:$0xff]
    %v44 = vld [vmem:[%s1 + $0x90] sm:$0xff]
    %v45 = vld [vmem:[%s1 + $0x98] sm:$0xff]
    %v46 = vld [vmem:[%s1 + $0xa0] sm:$0xff]
    %v47 = vld [vmem:[%s1 + $0xa8] sm:$0xff]
    %v48 = vld [vmem:[%s1 + $0xb0] sm:$0xff]
    %v49 = vld [vmem:[%s1 + $0xb8] sm:$0xff]
    %v50 = vld [vmem:[%s1 + $0xc0] sm:$0xff]
    %v51 = vld [vmem:[%s1 + $0xc8] sm:$0xff]
    %v52 = vld [vmem:[%s1 + $0xd0] sm:$0xff]
    %v53 = vld [vmem:[%s1 + $0xd8] sm:$0xff]
    %v54 = vld [vmem:[%s1 + $0xe0] sm:$0xff]
    %v55 = vld [vmem:[%s1 + $0xe8] sm:$0xff]
    %v56 = vld [vmem:[%s1 + $0xf0] sm:$0xff]
    %v57 = vld [vmem:[%s1 + $0xf8] sm:$0xff]
    %v58 = vld [vmem:[%s1 + $0x100] sm:$0xff]
    %v59 = vld [vmem:[%s1 + $0x108] sm:$0xff]
    %v60 = vld [vmem:[%s1 + $0x110] sm:$0xff]
    %v61 = vld [vmem:[%s1 + $0x118] sm:$0xff]
    %v62 = vld [vmem:[%s1 + $0x120] sm:$0xff]
    %v63 = vld [vmem:[%s1 + $0x128] sm:$0xff]
    %v64 = vld [vmem:[%s1 + $0x130] sm:$0xff]
    %v65 = vld [vmem:[%s1 + $0x138] sm:$0xff]
    %v66 = vld [vmem:[%s1 + $0x140] sm:$0xff]
    %v67 = vld [vmem:[%s1 + $0x148] sm:$0xff]
    %v68 = vld [vmem:[%s1 + $0x150] sm:$0xff]
    %v69 = vld [vmem:[%s1 + $0x158] sm:$0xff]
    %v70 = vld [vmem:[%s1 + $0x160] sm:$0xff]
    %v71 = vld [vmem:[%s1 + $0x168] sm:$0xff]
    %v72 = vld [vmem:[%s1 + $0x170] sm:$0xff]
    %v73 = vld [vmem:[%s1 + $0x178] sm:$0xff]
    %v74 = vld [vmem:[%s1 + $0x180] sm:$0xff]
    %v75 = vld [vmem:[%s1 + $0x188] sm:$0xff]
    %v76 = vld [vmem:[%s1 + $0x190] sm:$0xff]
    %v77 = vld [vmem:[%s1 + $0x198] sm:$0xff]
    %v78 = vld [vmem:[%s1 + $0x1a0] sm:$0xff]
    %v79 = vld [vmem:[%s1 + $0x1a8] sm:$0xff]
    %v80 = vld [vmem:[%s1 + $0x1b0] sm:$0xff]
    %v81 = vld [vmem:[%s1 + $0x1b8] sm:$0xff]
    %v82 = vld [vmem:[%s1 + $0x1c0] sm:$0xff]
    %v83 = vld [vmem:[%s1 + $0x1c8] sm:$0xff]
    %v84 = vld [vmem:[%s1 + $0x1d0] sm:$0xff]
    %v85 = vld [vmem:[%s1 + $0x1d8] sm:$0xff]
    %v86 = vld [vmem:[%s1 + $0x1e0] sm:$0xff]
    %v87 = vld [vmem:[%s1 + $0x1e8] sm:$0xff]
    %v88 = vld [vmem:[%s1 + $0x1f0] sm:$0xff]
    %v89 = vld [vmem:[%s1 + $0x1f8] sm:$0xff]
    %v90 = vld [vmem:[%s1 + $0x200] sm:$0xff]
    %v91 = vld [vmem:[%s1 + $0x208] sm:$0xff]
    %v92 = vld [vmem:[%s1 + $0x210] sm:$0xff]
    %v93 = vld [vmem:[%s1 + $0x218] sm:$0xff]
    %v94 = vld [vmem:[%s1 + $0x220] sm:$0xff]
    %v95 = vld [vmem:[%s1 + $0x228] sm:$0xff]
    %v96 = vld [vmem:[%s1 + $0x230] sm:$0xff]
    %v97 = vld [vmem:[%s1 + $0x238] sm:$0xff]
    %v98 = vld [vmem:[%s1 + $0x240] sm:$0xff]
    %v99 = vld [vmem:[%s1 + $0x248] sm:$0xff]
    %v100 = vld [vmem:[%s1 + $0x250] sm:$0xff]
    %v101 = vld [vmem:[%s1 + $0x258] sm:$0xff]
    %v102 = vld [vmem:[%s1 + $0x260] sm:$0xff]
    %v103 = vld [vmem:[%s1 + $0x268] sm:$0xff]
    %v104 = vld [vmem:[%s1 + $0x270] sm:$0xff]
    %v105 = vld [vmem:[%s1 + $0x278] sm:$0xff]
    %v106 = vld [vmem:[%s1 + $0x280] sm:$0xff]
    %v107 = vld [vmem:[%s1 + $0x288] sm:$0xff]
    %v108 = vld [vmem:[%s1 + $0x290] sm:$0xff]
    %v109 = vld [vmem:[%s1 + $0x298] sm:$0xff]
    %v110 = vld [vmem:[%s1 + $0x2a0] sm:$0xff]
    %v111 = vld [vmem:[%s1 + $0x2a8] sm:$0xff]
    %v112 = vld [vmem:[%s1 + $0x2b0] sm:$0xff]
    %v113 = vld [vmem:[%s1 + $0x2b8] sm:$0xff]
    %v114 = vld [vmem:[%s1 + $0x2c0] sm:$0xff]
    %v115 = vld [vmem:[%s1 + $0x2c8] sm:$0xff]
    %v116 = vld [vmem:[%s1 + $0x2d0] sm:$0xff]
    %v117 = vld [vmem:[%s1 + $0x2d8] sm:$0xff]
    %v118 = vld [vmem:[%s1 + $0x2e0] sm:$0xff]
    %v119 = vld [vmem:[%s1 + $0x2e8] sm:$0xff]
    %v120 = vld [vmem:[%s1 + $0x2f0] sm:$0xff]
    %v121 = vld [vmem:[%s1 + $0x2f8] sm:$0xff]
    %v122 = vld [vmem:[%s1 + $0x300] sm:$0xff]
    %v123 = vld [vmem:[%s1 + $0x308] sm:$0xff]
    %v124 = vld [vmem:[%s1 + $0x310] sm:$0xff]
    %v125 = vld [vmem:[%s1 + $0x318] sm:$0xff]
    %v126 = vld [vmem:[%s1 + $0x320] sm:$0xff]
    %v127 = vld [vmem:[%s1 + $0x328] sm:$0xff]
    %v128 = vld [vmem:[%s1 + $0x330] sm:$0xff]
    %v129 = vld [vmem:[%s1 + $0x338] sm:$0xff]
    %v130 = vld [vmem:[%s1 + $0x340] sm:$0xff]
    %v131 = vld [vmem:[%s1 + $0x348] sm:$0xff]
    %v132 = vld [vmem:[%s1 + $0x350] sm:$0xff]
    %v133 = vld [vmem:[%s1 + $0x358] sm:$0xff]
    %v134 = vld [vmem:[%s1 + $0x360] sm:$0xff]
    %v135 = vld [vmem:[%s1 + $0x368] sm:$0xff]
    %v136 = vld [vmem:[%s1 + $0x370] sm:$0xff]
    %v137 = vld [vmem:[%s1 + $0x378] sm:$0xff]
    %v138 = vld [vmem:[%s1 + $0x380] sm:$0xff]
    %v139 = vld [vmem:[%s1 + $0x388] sm:$0xff]
    %v140 = vld [vmem:[%s1 + $0x390] sm:$0xff]
    %v141 = vld [vmem:[%s1 + $0x398] sm:$0xff]
    %v142 = vld [vmem:[%s1 + $0x3a0] sm:$0xff]
    %v143 = vld [vmem:[%s1 + $0x3a8] sm:$0xff]
    %v144 = vld [vmem:[%s1 + $0x3b0] sm:$0xff]
    %v145 = vld [vmem:[%s1 + $0x3b8] sm:$0xff]
    %v146 = vld [vmem:[%s1 + $0x3c0] sm:$0xff]
    %v147 = vld [vmem:[%s1 + $0x3c8] sm:$0xff]
    %v148 = vld [vmem:[%s1 + $0x3d0] sm:$0xff]
    %v149 = vld [vmem:[%s1 + $0x3d8] sm:$0xff]
    %v150 = vld [vmem:[%s1 + $0x3e0] sm:$0xff]
    %v151 = vld [vmem:[%s1 + $0x3e8] sm:$0xff]
    %v152 = vld [vmem:[%s1 + $0x3f0] sm:$0xff]
    %v153 = vld [vmem:[%s1 + $0x3f8] sm:$0xff]
    %v154 = vld [vmem:[%s3] sm:$0x1]
    %v155 = vlaneseq
    %v156 = vshrl.u32 %v155, 7
    %v157 = vsub.s32 0, %v156
    %v158 = vrot.slane %v154, %v157
    %159 = vmatprep.subr.mxu0 0.0
    %160 = vmatpush1.msra.mxu0 %v41
    %161 = vmatprep.subr.mxu0 0.0
    %162 = vmatpush1.msra.mxu0 %v40
    %163 = vmatprep.subr.mxu0 0.0
    %164 = vmatpush1.msra.mxu0 %v39
    %165 = vmatprep.subr.mxu0 0.0
    %166 = vmatpush1.msra.mxu0 %v38
    %167 = vmatprep.subr.mxu0 0.0
    %168 = vmatpush1.msra.mxu0 %v37
    %169 = vmatprep.subr.mxu0 0.0
    %170 = vmatpush1.msra.mxu0 %v36
    %171 = vmatprep.subr.mxu0 0.0
    %172 = vmatpush1.msra.mxu0 %v35
    %173 = vmatprep.subr.mxu0 0.0
    %174 = vmatpush1.msra.mxu0 %v34
    %175 = vmatprep.subr.mxu0 0.0
    %176 = vmatpush1.msra.mxu0 %v33
    %177 = vmatprep.subr.mxu0 0.0
    %178 = vmatpush1.msra.mxu0 %v32
    %179 = vmatprep.subr.mxu0 0.0
    %180 = vmatpush1.msra.mxu0 %v31
    %181 = vmatprep.subr.mxu0 0.0
    %182 = vmatpush1.msra.mxu0 %v30
    %183 = vmatprep.subr.mxu0 0.0
    %184 = vmatpush1.msra.mxu0 %v29
    %185 = vmatprep.subr.mxu0 0.0
    %186 = vmatpush1.msra.mxu0 %v28
    %187 = vmatprep.subr.mxu0 0.0
    %188 = vmatpush1.msra.mxu0 %v27
    %189 = vmatprep.subr.mxu0 0.0
    %190 = vmatpush1.msra.mxu0 %v26
    %191 = vmatprep.subr.mxu0 0.0
    %192 = vmatpush2.msra.mxu0 %v57
    %193 = vmatprep.subr.mxu0 0.0
    %194 = vmatpush2.msra.mxu0 %v56
    %195 = vmatprep.subr.mxu0 0.0
    %196 = vmatpush2.msra.mxu0 %v55
    %197 = vmatprep.subr.mxu0 0.0
    %198 = vmatpush2.msra.mxu0 %v54
    %199 = vmatprep.subr.mxu0 0.0
    %200 = vmatpush2.msra.mxu0 %v53
    %201 = vmatprep.subr.mxu0 0.0
    %202 = vmatpush2.msra.mxu0 %v52
    %203 = vmatprep.subr.mxu0 0.0
    %204 = vmatpush2.msra.mxu0 %v51
    %205 = vmatprep.subr.mxu0 0.0
    %206 = vmatpush2.msra.mxu0 %v50
    %207 = vmatprep.subr.mxu0 0.0
    %208 = vmatpush2.msra.mxu0 %v49
    %209 = vmatprep.subr.mxu0 0.0
    %210 = vmatpush2.msra.mxu0 %v48
    %211 = vmatprep.subr.mxu0 0.0
    %212 = vmatpush2.msra.mxu0 %v47
    %213 = vmatprep.subr.mxu0 0.0
    %214 = vmatpush2.msra.mxu0 %v46
    %215 = vmatprep.subr.mxu0 0.0
    %216 = vmatpush2.msra.mxu0 %v45
    %217 = vmatprep.subr.mxu0 0.0
    %218 = vmatpush2.msra.mxu0 %v44
    %219 = vmatprep.subr.mxu0 0.0
    %220 = vmatpush2.msra.mxu0 %v43
    %221 = vmatprep.subr.mxu0 0.0
    %222 = vmatpush2.msra.mxu0 %v42
    %223 = vmatprep.mubr.f32.mxu0 %v19
    %224 = vmatmul.mubr.f32.gmra.mxu0 %v18
    %v225 = vpop.f32.mrf.mxu0
    %v226 = vadd.f32 %v158, %v225
    %v227 = vpop.f32.mrf.mxu0
    %228 = vdwg.mxu0
    %229 = vmatprep.subr.mxu0 0.0
    %230 = vmatpush1.msra.mxu0 %v73
    %231 = vmatprep.subr.mxu0 0.0
    %232 = vmatpush1.msra.mxu0 %v72
    %233 = vmatprep.subr.mxu0 0.0
    %234 = vmatpush1.msra.mxu0 %v71
    %235 = vmatprep.subr.mxu0 0.0
    %236 = vmatpush1.msra.mxu0 %v70
    %237 = vmatprep.subr.mxu0 0.0
    %238 = vmatpush1.msra.mxu0 %v69
    %239 = vmatprep.subr.mxu0 0.0
    %240 = vmatpush1.msra.mxu0 %v68
    %241 = vmatprep.subr.mxu0 0.0
    %242 = vmatpush1.msra.mxu0 %v67
    %243 = vmatprep.subr.mxu0 0.0
    %244 = vmatpush1.msra.mxu0 %v66
    %245 = vmatprep.subr.mxu0 0.0
    %246 = vmatpush1.msra.mxu0 %v65
    %247 = vmatprep.subr.mxu0 0.0
    %248 = vmatpush1.msra.mxu0 %v64
    %249 = vmatprep.subr.mxu0 0.0
    %250 = vmatpush1.msra.mxu0 %v63
    %251 = vmatprep.subr.mxu0 0.0
    %252 = vmatpush1.msra.mxu0 %v62
    %253 = vmatprep.subr.mxu0 0.0
    %254 = vmatpush1.msra.mxu0 %v61
    %255 = vmatprep.subr.mxu0 0.0
    %256 = vmatpush1.msra.mxu0 %v60
    %257 = vmatprep.subr.mxu0 0.0
    %258 = vmatpush1.msra.mxu0 %v59
    %259 = vmatprep.subr.mxu0 0.0
    %260 = vmatpush1.msra.mxu0 %v58
    %261 = vmatprep.subr.mxu0 0.0
    %262 = vmatpush2.msra.mxu0 %v89
    %263 = vmatprep.subr.mxu0 0.0
    %264 = vmatpush2.msra.mxu0 %v88
    %265 = vmatprep.subr.mxu0 0.0
    %266 = vmatpush2.msra.mxu0 %v87
    %267 = vmatprep.subr.mxu0 0.0
    %268 = vmatpush2.msra.mxu0 %v86
    %269 = vmatprep.subr.mxu0 0.0
    %270 = vmatpush2.msra.mxu0 %v85
    %271 = vmatprep.subr.mxu0 0.0
    %272 = vmatpush2.msra.mxu0 %v84
    %273 = vmatprep.subr.mxu0 0.0
    %274 = vmatpush2.msra.mxu0 %v83
    %275 = vmatprep.subr.mxu0 0.0
    %276 = vmatpush2.msra.mxu0 %v82
    %277 = vmatprep.subr.mxu0 0.0
    %278 = vmatpush2.msra.mxu0 %v81
    %279 = vmatprep.subr.mxu0 0.0
    %280 = vmatpush2.msra.mxu0 %v80
    %281 = vmatprep.subr.mxu0 0.0
    %282 = vmatpush2.msra.mxu0 %v79
    %283 = vmatprep.subr.mxu0 0.0
    %284 = vmatpush2.msra.mxu0 %v78
    %285 = vmatprep.subr.mxu0 0.0
    %286 = vmatpush2.msra.mxu0 %v77
    %287 = vmatprep.subr.mxu0 0.0
    %288 = vmatpush2.msra.mxu0 %v76
    %289 = vmatprep.subr.mxu0 0.0
    %290 = vmatpush2.msra.mxu0 %v75
    %291 = vmatprep.subr.mxu0 0.0
    %292 = vmatpush2.msra.mxu0 %v74
    %293 = vmatprep.mubr.f32.mxu0 %v21
    %294 = vmatmul.mubr.f32.gmra.mxu0 %v20
    %v295 = vpop.f32.mrf.mxu0
    %v296 = vadd.f32 %v226, %v295
    %v297 = vpop.f32.mrf.mxu0
    %298 = vdwg.mxu0
    %299 = vmatprep.subr.mxu0 0.0
    %300 = vmatpush1.msra.mxu0 %v105
    %301 = vmatprep.subr.mxu0 0.0
    %302 = vmatpush1.msra.mxu0 %v104
    %303 = vmatprep.subr.mxu0 0.0
    %304 = vmatpush1.msra.mxu0 %v103
    %305 = vmatprep.subr.mxu0 0.0
    %306 = vmatpush1.msra.mxu0 %v102
    %307 = vmatprep.subr.mxu0 0.0
    %308 = vmatpush1.msra.mxu0 %v101
    %309 = vmatprep.subr.mxu0 0.0
    %310 = vmatpush1.msra.mxu0 %v100
    %311 = vmatprep.subr.mxu0 0.0
    %312 = vmatpush1.msra.mxu0 %v99
    %313 = vmatprep.subr.mxu0 0.0
    %314 = vmatpush1.msra.mxu0 %v98
    %315 = vmatprep.subr.mxu0 0.0
    %316 = vmatpush1.msra.mxu0 %v97
    %317 = vmatprep.subr.mxu0 0.0
    %318 = vmatpush1.msra.mxu0 %v96
    %319 = vmatprep.subr.mxu0 0.0
    %320 = vmatpush1.msra.mxu0 %v95
    %321 = vmatprep.subr.mxu0 0.0
    %322 = vmatpush1.msra.mxu0 %v94
    %323 = vmatprep.subr.mxu0 0.0
    %324 = vmatpush1.msra.mxu0 %v93
    %325 = vmatprep.subr.mxu0 0.0
    %326 = vmatpush1.msra.mxu0 %v92
    %327 = vmatprep.subr.mxu0 0.0
    %328 = vmatpush1.msra.mxu0 %v91
    %329 = vmatprep.subr.mxu0 0.0
    %330 = vmatpush1.msra.mxu0 %v90
    %331 = vmatprep.subr.mxu0 0.0
    %332 = vmatpush2.msra.mxu0 %v121
    %333 = vmatprep.subr.mxu0 0.0
    %334 = vmatpush2.msra.mxu0 %v120
    %335 = vmatprep.subr.mxu0 0.0
    %336 = vmatpush2.msra.mxu0 %v119
    %337 = vmatprep.subr.mxu0 0.0
    %338 = vmatpush2.msra.mxu0 %v118
    %339 = vmatprep.subr.mxu0 0.0
    %340 = vmatpush2.msra.mxu0 %v117
    %341 = vmatprep.subr.mxu0 0.0
    %342 = vmatpush2.msra.mxu0 %v116
    %343 = vmatprep.subr.mxu0 0.0
    %344 = vmatpush2.msra.mxu0 %v115
    %345 = vmatprep.subr.mxu0 0.0
    %346 = vmatpush2.msra.mxu0 %v114
    %347 = vmatprep.subr.mxu0 0.0
    %348 = vmatpush2.msra.mxu0 %v113
    %349 = vmatprep.subr.mxu0 0.0
    %350 = vmatpush2.msra.mxu0 %v112
    %351 = vmatprep.subr.mxu0 0.0
    %352 = vmatpush2.msra.mxu0 %v111
    %353 = vmatprep.subr.mxu0 0.0
    %354 = vmatpush2.msra.mxu0 %v110
    %355 = vmatprep.subr.mxu0 0.0
    %356 = vmatpush2.msra.mxu0 %v109
    %357 = vmatprep.subr.mxu0 0.0
    %358 = vmatpush2.msra.mxu0 %v108
    %359 = vmatprep.subr.mxu0 0.0
    %360 = vmatpush2.msra.mxu0 %v107
    %361 = vmatprep.subr.mxu0 0.0
    %362 = vmatpush2.msra.mxu0 %v106
    %363 = vmatprep.mubr.f32.mxu0 %v23
    %364 = vmatmul.mubr.f32.gmra.mxu0 %v22
    %v365 = vpop.f32.mrf.mxu0
    %v366 = vadd.f32 %v296, %v365
    %v367 = vpop.f32.mrf.mxu0
    %368 = vdwg.mxu0
    %369 = vmatprep.subr.mxu0 0.0
    %370 = vmatpush1.msra.mxu0 %v137
    %371 = vmatprep.subr.mxu0 0.0
    %372 = vmatpush1.msra.mxu0 %v136
    %373 = vmatprep.subr.mxu0 0.0
    %374 = vmatpush1.msra.mxu0 %v135
    %375 = vmatprep.subr.mxu0 0.0
    %376 = vmatpush1.msra.mxu0 %v134
    %377 = vmatprep.subr.mxu0 0.0
    %378 = vmatpush1.msra.mxu0 %v133
    %379 = vmatprep.subr.mxu0 0.0
    %380 = vmatpush1.msra.mxu0 %v132
    %381 = vmatprep.subr.mxu0 0.0
    %382 = vmatpush1.msra.mxu0 %v131
    %383 = vmatprep.subr.mxu0 0.0
    %384 = vmatpush1.msra.mxu0 %v130
    %385 = vmatprep.subr.mxu0 0.0
    %386 = vmatpush1.msra.mxu0 %v129
    %387 = vmatprep.subr.mxu0 0.0
    %388 = vmatpush1.msra.mxu0 %v128
    %389 = vmatprep.subr.mxu0 0.0
    %390 = vmatpush1.msra.mxu0 %v127
    %391 = vmatprep.subr.mxu0 0.0
    %392 = vmatpush1.msra.mxu0 %v126
    %393 = vmatprep.subr.mxu0 0.0
    %394 = vmatpush1.msra.mxu0 %v125
    %395 = vmatprep.subr.mxu0 0.0
    %396 = vmatpush1.msra.mxu0 %v124
    %397 = vmatprep.subr.mxu0 0.0
    %398 = vmatpush1.msra.mxu0 %v123
    %399 = vmatprep.subr.mxu0 0.0
    %400 = vmatpush1.msra.mxu0 %v122
    %401 = vmatprep.subr.mxu0 0.0
    %402 = vmatpush2.msra.mxu0 %v153
    %403 = vmatprep.subr.mxu0 0.0
    %404 = vmatpush2.msra.mxu0 %v152
    %405 = vmatprep.subr.mxu0 0.0
    %406 = vmatpush2.msra.mxu0 %v151
    %407 = vmatprep.subr.mxu0 0.0
    %408 = vmatpush2.msra.mxu0 %v150
    %409 = vmatprep.subr.mxu0 0.0
    %410 = vmatpush2.msra.mxu0 %v149
    %411 = vmatprep.subr.mxu0 0.0
    %412 = vmatpush2.msra.mxu0 %v148
    %413 = vmatprep.subr.mxu0 0.0
    %414 = vmatpush2.msra.mxu0 %v147
    %415 = vmatprep.subr.mxu0 0.0
    %416 = vmatpush2.msra.mxu0 %v146
    %417 = vmatprep.subr.mxu0 0.0
    %418 = vmatpush2.msra.mxu0 %v145
    %419 = vmatprep.subr.mxu0 0.0
    %420 = vmatpush2.msra.mxu0 %v144
    %421 = vmatprep.subr.mxu0 0.0
    %422 = vmatpush2.msra.mxu0 %v143
    %423 = vmatprep.subr.mxu0 0.0
    %424 = vmatpush2.msra.mxu0 %v142
    %425 = vmatprep.subr.mxu0 0.0
    %426 = vmatpush2.msra.mxu0 %v141
    %427 = vmatprep.subr.mxu0 0.0
    %428 = vmatpush2.msra.mxu0 %v140
    %429 = vmatprep.subr.mxu0 0.0
    %430 = vmatpush2.msra.mxu0 %v139
    %431 = vmatprep.subr.mxu0 0.0
    %432 = vmatpush2.msra.mxu0 %v138
    %433 = vmatprep.mubr.f32.mxu0 %v25
    %434 = vmatmul.mubr.f32.gmra.mxu0 %v24
    %v435 = vpop.f32.mrf.mxu0
    %v436 = vadd.f32 %v366, %v435
    %v437 = vpop.f32.mrf.mxu0
    %438 = vdwg.mxu0
    %v439 = vmax.f32 %v436, 0.0
    %v440 = vld [vmem:[%s2] sm:$0xff]
    %v441 = vld [vmem:[%s2 + $0x8] sm:$0xff]
    %v442 = vld [vmem:[%s2 + $0x10] sm:$0xff]
    %v443 = vld [vmem:[%s2 + $0x18] sm:$0xff]
    %v444 = vld [vmem:[%s2 + $0x20] sm:$0xff]
    %v445 = vld [vmem:[%s2 + $0x28] sm:$0xff]
    %v446 = vld [vmem:[%s2 + $0x30] sm:$0xff]
    %v447 = vld [vmem:[%s2 + $0x38] sm:$0xff]
    %s448 = scalar_lea.vmem %s3, 1
    %v449 = vld [vmem:[%s448] ss:$4 sm:$0x3]
    %v451 = vlaneseq
    %v452 = vshrl.u32 %v451, 7
    %v453 = vsub.s32 0, %v452
    %v454 = vrot.slane %v449, %v453
    %v455 = vlaneseq
    %v456 = vshrl.u32 %v455, 7
    %v457 = vsub.s32 1, %v456
    %v458 = vrot.slane %v449, %v457
    %vm461 = vcmask 261120
    %v463 = vsel %vm461, %v439, 0
    %465 = vmatprep.subr.mxu0 0.0
    %466 = vmatpush1.msra.mxu0 0.0
    %467 = vmatprep.subr.mxu0 0.0
    %468 = vmatpush1.msra.mxu0 0.0
    %469 = vmatprep.subr.mxu0 0.0
    %470 = vmatpush1.msra.mxu0 0.0
    %471 = vmatprep.subr.mxu0 0.0
    %472 = vmatpush1.msra.mxu0 0.0
    %473 = vmatprep.subr.mxu0 0.0
    %474 = vmatpush1.msra.mxu0 0.0
    %475 = vmatprep.subr.mxu0 0.0
    %476 = vmatpush1.msra.mxu0 0.0
    %477 = vmatprep.subr.mxu0 0.0
    %478 = vmatpush1.msra.mxu0 0.0
    %479 = vmatprep.subr.mxu0 0.0
    %480 = vmatpush1.msra.mxu0 0.0
    %481 = vmatprep.subr.mxu0 0.0
    %482 = vmatpush1.msra.mxu0 0.0
    %483 = vmatprep.subr.mxu0 0.0
    %484 = vmatpush1.msra.mxu0 0.0
    %485 = vmatprep.subr.mxu0 0.0
    %486 = vmatpush1.msra.mxu0 0.0
    %487 = vmatprep.subr.mxu0 0.0
    %488 = vmatpush1.msra.mxu0 0.0
    %489 = vmatprep.subr.mxu0 %v447
    %490 = vmatpush1.msra.mxu0 %v446
    %491 = vmatprep.subr.mxu0 %v445
    %492 = vmatpush1.msra.mxu0 %v444
    %493 = vmatprep.subr.mxu0 %v443
    %494 = vmatpush1.msra.mxu0 %v442
    %495 = vmatprep.subr.mxu0 %v441
    %496 = vmatpush1.msra.mxu0 %v440
    %497 = vmatprep.subr.mxu0 0.0
    %498 = vmatpush2.msra.mxu0 0.0
    %499 = vmatprep.subr.mxu0 0.0
    %500 = vmatpush2.msra.mxu0 0.0
    %501 = vmatprep.subr.mxu0 0.0
    %502 = vmatpush2.msra.mxu0 0.0
    %503 = vmatprep.subr.mxu0 0.0
    %504 = vmatpush2.msra.mxu0 0.0
    %505 = vmatprep.subr.mxu0 0.0
    %506 = vmatpush2.msra.mxu0 0.0
    %507 = vmatprep.subr.mxu0 0.0
    %508 = vmatpush2.msra.mxu0 0.0
    %509 = vmatprep.subr.mxu0 0.0
    %510 = vmatpush2.msra.mxu0 0.0
    %511 = vmatprep.subr.mxu0 0.0
    %512 = vmatpush2.msra.mxu0 0.0
    %513 = vmatprep.subr.mxu0 0.0
    %514 = vmatpush2.msra.mxu0 0.0
    %515 = vmatprep.subr.mxu0 0.0
    %516 = vmatpush2.msra.mxu0 0.0
    %517 = vmatprep.subr.mxu0 0.0
    %518 = vmatpush2.msra.mxu0 0.0
    %519 = vmatprep.subr.mxu0 0.0
    %520 = vmatpush2.msra.mxu0 0.0
    %521 = vmatprep.subr.mxu0 0.0
    %522 = vmatpush2.msra.mxu0 0.0
    %523 = vmatprep.subr.mxu0 0.0
    %524 = vmatpush2.msra.mxu0 0.0
    %525 = vmatprep.subr.mxu0 0.0
    %526 = vmatpush2.msra.mxu0 0.0
    %527 = vmatprep.subr.mxu0 0.0
    %528 = vmatpush2.msra.mxu0 0.0
    %529 = vmatprep.mubr.f32.mxu0 0.0
    %530 = vmatmul.mubr.f32.gmra.mxu0 %v463
    %v531 = vpop.f32.mrf.mxu0
    %v532 = vadd.f32 %v454, %v531
    %v533 = vpop.f32.mrf.mxu0
    %v534 = vadd.f32 %v458, %v533
    %535 = vdwg.mxu0
    %v536 = vtanh.pop %v532
    %v537 = vxor.u32 %v532, 2147483648
    %v538 = vmul.f32 %v537, 1.442695
    %v539 = vpow.pop %v538
    %v540 = vadd.f32 %v539, 1.0
    %v541 = vrcp.pop %v540
    %v542 = vmul.f32 1.0, %v541
    %v543 = vld [vmem:[%s3 + $0x2] sm:$0x1]
    %545 = vrot.lane.b32.xlu0 %v542, 64
    %v546 = vpop.permute.xlu0 %545
    %v548 = vmul.f32 %v536, %v546
    %v549 = vlaneseq
    %v550 = vshrl.u32 %v549, 7
    %v551 = vsub.s32 0, %v550
    %v552 = vrot.slane %v543, %v551
    %v553 = vmul.f32 %v548, %v552
    %vm554 = vcmask 523264
    %v555 = vsel %vm554, %v553, 0.0
    %556 = vadd.xlane.f32.xlu0 %v555
    %v557 = vpop.xlane.xlu0 %556
    %v558 = vrot.slane %v557, 4
    %v559 = vmax.f32 %v557, %v558
    %v560 = vrot.slane %v559, 2
    %v561 = vmax.f32 %v559, %v560
    %v562 = vrot.slane %v561, 1
    %v563 = vmax.f32 %v561, %v562
    %v564 = vsub.f32 %v557, %v563
    %v565 = vmul.f32 %v564, 1.442695
    %v566 = vpow.pop %v565
    %v567 = vrot.slane %v566, 4
    %v568 = vadd.f32 %v566, %v567
    %v569 = vrot.slane %v568, 2
    %v570 = vadd.f32 %v568, %v569
    %v571 = vrot.slane %v570, 1
    %v572 = vadd.f32 %v570, %v571
    %v573 = vrcp.pop %v572
    %v574 = vmul.f32 %v572, %v573
    %v575 = vsub.f32 2.0, %v574
    %v576 = vmul.f32 %v573, %v575
    %v577 = vmul.f32 %v566, %v576
    %v578 = vmul.f32 %v577, %v534
    %v579 = vrot.slane %v578, 4
    %v580 = vadd.f32 %v578, %v579
    %v581 = vrot.slane %v580, 2
    %v582 = vadd.f32 %v580, %v581
    %v583 = vrot.slane %v582, 1
    %v584 = vadd.f32 %v582, %v583
    %585 = vst [vmem:[#allocation2] sm:$0xff] %v534
    %586 = vst [vmem:[#allocation2 + $0x8] sm:$0x1] %v584
    // Predicated region
    $region18: #{tpu_custom_call.1} parent=1 // pred_check
      _
    $region19: #{tpu_custom_call.1} parent=1 // pred_check_branch
      %588 = sbr.rel (0) target = $region21
    $region20: #{tpu_custom_call.1} parent=1 // pred_region
      %s590 = ssub.s32 256, 256
      %591 = vsyncadd [#allocation3], %s590
      %s592 = sshll.u32 [#allocation2], 4
      %s593 = int_to_ptr.vmem [resolvable:$true] %s592
      %598 = dma.vmem_to_hbm [thread:$0]  %s593, 256, %s4, [#allocation3], 128, 128, 8
    $region21: #{tpu_custom_call.1} parent=1 // pred_fallthru
      _
    // Predicated region
    $region22: #{tpu_custom_call.1} parent=1 // pred_check
      _
    $region23: #{tpu_custom_call.1} parent=1 // pred_check_branch
      %600 = sbr.rel (0) target = $region25
    $region24: #{tpu_custom_call.1} parent=1 // pred_region
      %601 = dma.done [#allocation3], 256
    $region25: #{tpu_custom_call.1} parent=1 // pred_fallthru
      _
    %602 = vsyncpa [#allocation3], 1

</llo_original>
